<compile_context>
chip_gen: v6e
topology: v6e:2x2x1
jax: 0.10.0
libtpu: 0.0.40
codegen_flags: <defaults>
</compile_context>

<pallas_src>
import functools

import jax
import jax.numpy as jnp
from jax.experimental import pallas as pl
from jax.experimental.pallas import tpu as pltpu


def _nce_loss_kernel(pred_ref, tgt_ref, out_ref, acc_ref, *,
                     classes, smoothing, total_n, tm):
    """One grid step: a (tm, C) tile of logits -> per-row log(s) accumulated in VMEM."""
    i = pl.program_id(0)

    @pl.when(i == 0)
    def _():
        acc_ref[...] = jnp.zeros_like(acc_ref)

    x = pred_ref[...].astype(jnp.float32)                        # (tm, C)
    C = x.shape[-1]

    # log-sum-exp over the class (lane) axis
    m = jnp.max(x, axis=-1, keepdims=True)                       # (tm, 1)
    lse = m + jnp.log(jnp.sum(jnp.exp(x - m), axis=-1, keepdims=True))

    # gather the target logit x_t via a one-hot lane mask (resident target slab)
    row0 = pl.multiple_of(i * tm, 8)
    tgt = tgt_ref[pl.ds(row0, tm), :]                            # (tm, 1) int32
    cols = jax.lax.broadcasted_iota(jnp.int32, (tm, C), 1)
    onehot = (cols == tgt).astype(jnp.float32)
    x_t = jnp.sum(onehot * x, axis=-1, keepdims=True)            # (tm, 1)

    confidence = 1.0 - smoothing
    smooth_val = smoothing / (classes - 1)
    # s = sum(true_dist * softmax(x)) = smooth_val + (conf - smooth_val) * p[target]
    p_t = jnp.exp(x_t - lse)                                     # (tm, 1)
    s = smooth_val + (confidence - smooth_val) * p_t

    # mask padded rows (wrapper pads N up to a multiple of tm with zero rows)
    rows = jax.lax.broadcasted_iota(jnp.int32, (tm, 1), 0) + i * tm
    valid = rows < total_n
    acc_ref[...] += jnp.where(valid, jnp.log(s), 0.0)

    @pl.when(i == pl.num_programs(0) - 1)
    def _():
        total = jnp.sum(acc_ref[...])                            # single epilogue reduce
        out_ref[...] = jnp.reshape(-total / jnp.float32(total_n), (1, 1))


def _pick_tm(n, c, itemsize):
    """Largest row tile that keeps the double-buffered pred tile within ~8 MiB."""
    budget = 8 * 1024 * 1024
    tm = budget // (2 * max(c, 1) * itemsize)
    tm = max(8, min(int(tm), 1024))
    tm = (tm // 8) * 8
    n_pad8 = ((n + 7) // 8) * 8
    return min(tm, n_pad8)


def label_smoothing_nce_loss(pred, target, *, classes, smoothing=0.0, tm=None):
    """pred: (N, C) float (f32/bf16), target: (N,) int. Returns scalar float32 loss."""
    N, C = pred.shape
    assert C == classes
    assert classes > 1, "smoothing/(classes-1) requires classes > 1"

    if tm is None:
        tm = _pick_tm(N, C, pred.dtype.itemsize)

    # pad batch to a multiple of tm (padded rows are masked inside the kernel)
    n_pad = pl.cdiv(N, tm) * tm
    if n_pad != N:
        pred = jnp.pad(pred, ((0, n_pad - N), (0, 0)))
        target = jnp.pad(target, (0, n_pad - N))
    tgt2d = target.reshape(n_pad, 1).astype(jnp.int32)

    kernel = functools.partial(
        _nce_loss_kernel, classes=classes, smoothing=float(smoothing),
        total_n=N, tm=tm)

    out = pl.pallas_call(
        kernel,
        out_shape=jax.ShapeDtypeStruct((1, 1), jnp.float32),
        grid_spec=pltpu.PrefetchScalarGridSpec(
            num_scalar_prefetch=0,
            grid=(n_pad // tm,),
            in_specs=[
                # pred row tiles, streamed/pipelined
                pl.BlockSpec((tm, C), lambda i: (i, 0)),
                # target: one resident full-array block (same block index every step)
                pl.BlockSpec((n_pad, 1), lambda i: (0, 0)),
            ],
            out_specs=pl.BlockSpec((1, 1), lambda i: (0, 0)),    # scalar output
            scratch_shapes=[pltpu.VMEM((tm, 1), jnp.float32)],   # per-row accumulator
        ),
        compiler_params=pltpu.CompilerParams(
            dimension_semantics=("arbitrary",),                  # reduction axis
            vmem_limit_bytes=32 * 1024 * 1024,                   # safe on v5e/v6e/v7x
        ),
    )(pred, tgt2d)
    # TODO(synk): on v7x (2 TensorCores) add a leading "parallel" grid axis of size 2
    # with per-core partial sums combined outside the kernel for ~2x.
    return out[0, 0]


def _reference_loss(pred, target, *, classes, smoothing):
    p = jax.nn.softmax(pred.astype(jnp.float32), axis=-1)
    confidence = 1.0 - smoothing
    true_dist = jnp.full_like(p, smoothing / (classes - 1))
    true_dist = true_dist.at[jnp.arange(p.shape[0]), target].set(confidence)
    return -jnp.mean(jnp.log(jnp.sum(true_dist * p, axis=-1)))


if __name__ == "__main__":
    key = jax.random.PRNGKey(0)
    N, C = 16, 32            # small shapes consistent with the module: batch=16, classes=32
    smoothing = 0.1

    kp, kt = jax.random.split(key)
    pred = jax.random.normal(kp, (N, C), dtype=jnp.float32)
    target = jax.random.randint(kt, (N,), 0, C, dtype=jnp.int32)

    loss = label_smoothing_nce_loss(pred, target, classes=C, smoothing=smoothing)
    loss = jax.block_until_ready(loss)

    ref = _reference_loss(pred, target, classes=C, smoothing=smoothing)
    assert jnp.allclose(loss, ref, atol=1e-5, rtol=1e-5), (loss, ref)

    # also exercise a ragged batch (N not a multiple of the tile) to cover the mask path
    N2 = 13
    pred2 = jax.random.normal(kp, (N2, C), dtype=jnp.float32)
    target2 = jax.random.randint(kt, (N2,), 0, C, dtype=jnp.int32)
    loss2 = jax.block_until_ready(
        label_smoothing_nce_loss(pred2, target2, classes=C, smoothing=smoothing))
    ref2 = _reference_loss(pred2, target2, classes=C, smoothing=smoothing)
    assert jnp.allclose(loss2, ref2, atol=1e-5, rtol=1e-5), (loss2, ref2)

    print("KERNEL_OK")
</pallas_src>

<mosaic_0001>
module attributes {stable_mosaic.version = 11 : i64} {
  func.func @_nce_loss_kernel(%arg0: i32, %arg1: memref<16x32xf32, #tpu.memory_space<vmem>>, %arg2: memref<16x1xi32, #tpu.memory_space<vmem>>, %arg3: memref<1x1xf32, #tpu.memory_space<vmem>>, %arg4: memref<16x1xf32, #tpu.memory_space<vmem>>) attributes {dimension_semantics = [#tpu.dimension_semantics<arbitrary>], iteration_bounds = array<i64: 1>, scalar_prefetch = 0 : i64, scratch_operands = 1 : i64, tpu.core_type = #tpu.core_type<tc>, window_params = [{transform_indices = @transform_0, window_bounds = array<i64: 16, 32>}, {pipeline_mode = #tpu.pipeline_mode<synchronous>, transform_indices = @transform_1, window_bounds = array<i64: 16, 1>}, {pipeline_mode = #tpu.pipeline_mode<synchronous>, transform_indices = @transform_2, window_bounds = array<i64: 1, 1>}]} {
    %c0_i32 = arith.constant 0 : i32
    %0 = arith.cmpi eq, %arg0, %c0_i32 : i32
    %1 = arith.extui %0 : i1 to i32
    %c0_i32_0 = arith.constant 0 : i32
    %2 = arith.cmpi ne, %1, %c0_i32_0 : i32
    scf.if %2 {
      %cst_16 = arith.constant 0.000000e+00 : f32
      %46 = vector.broadcast %cst_16 : f32 to vector<16x1xf32>
      %c0_17 = arith.constant 0 : index
      %c0_18 = arith.constant 0 : index
      %47 = vector.load %arg4[%c0_17, %c0_18] : memref<16x1xf32, #tpu.memory_space<vmem>>, vector<16x1xf32>
      tpu.vector_store %arg4[%c0_17, %c0_18], %46 {strides = array<i32>} : memref<16x1xf32, #tpu.memory_space<vmem>>, vector<16x1xf32>,
    } else {
    }
    %c0 = arith.constant 0 : index
    %c0_1 = arith.constant 0 : index
    %3 = vector.load %arg1[%c0, %c0_1] : memref<16x32xf32, #tpu.memory_space<vmem>>, vector<16x32xf32>
    %cst = arith.constant dense<0xFF800000> : vector<16xf32>
    %4 = vector.multi_reduction <maximumf>, %3, %cst [1] : vector<16x32xf32> to vector<16xf32>
    %5 = vector.shape_cast %4 : vector<16xf32> to vector<16x1xf32>
    %6 = vector.broadcast %5 : vector<16x1xf32> to vector<16x32xf32>
    %7 = arith.subf %3, %6 : vector<16x32xf32>
    %8 = math.exp %7 : vector<16x32xf32>
    %cst_2 = arith.constant dense<0.000000e+00> : vector<16xf32>
    %9 = vector.multi_reduction <add>, %8, %cst_2 [1] : vector<16x32xf32> to vector<16xf32>
    %10 = vector.shape_cast %9 : vector<16xf32> to vector<16x1xf32>
    %11 = math.log %10 : vector<16x1xf32>
    %12 = arith.addf %5, %11 : vector<16x1xf32>
    %c16_i32 = arith.constant 16 : i32
    %13 = arith.muli %arg0, %c16_i32 : i32
    %14 = tpu.assume_multiple %13, 8 : i32
    %15 = arith.index_cast %14 : i32 to index
    %c0_3 = arith.constant 0 : index
    %16 = vector.load %arg2[%15, %c0_3] : memref<16x1xi32, #tpu.memory_space<vmem>>, vector<16x1xi32>
    %17 = tpu.iota {dimensions = array<i32: 1>} : vector<16x32xi32>
    %18 = vector.broadcast %16 : vector<16x1xi32> to vector<16x32xi32>
    %19 = arith.cmpi eq, %17, %18 : vector<16x32xi32>
    %20 = arith.extui %19 : vector<16x32xi1> to vector<16x32xi32>
    %21 = arith.sitofp %20 : vector<16x32xi32> to vector<16x32xf32>
    %22 = arith.mulf %21, %3 : vector<16x32xf32>
    %cst_4 = arith.constant dense<0.000000e+00> : vector<16xf32>
    %23 = vector.multi_reduction <add>, %22, %cst_4 [1] : vector<16x32xf32> to vector<16xf32>
    %24 = vector.shape_cast %23 : vector<16xf32> to vector<16x1xf32>
    %25 = arith.subf %24, %12 : vector<16x1xf32>
    %26 = math.exp %25 : vector<16x1xf32>
    %cst_5 = arith.constant 0.896774172 : f32
    %27 = vector.broadcast %cst_5 : f32 to vector<16x1xf32>
    %28 = arith.mulf %27, %26 : vector<16x1xf32>
    %cst_6 = arith.constant 0.0032258064 : f32
    %29 = vector.broadcast %cst_6 : f32 to vector<16x1xf32>
    %30 = arith.addf %29, %28 : vector<16x1xf32>
    %31 = tpu.iota {dimensions = array<i32: 0>} : vector<16x1xi32>
    %c16_i32_7 = arith.constant 16 : i32
    %32 = arith.muli %arg0, %c16_i32_7 : i32
    %33 = vector.broadcast %32 : i32 to vector<16x1xi32>
    %34 = arith.addi %31, %33 : vector<16x1xi32>
    %c16_i32_8 = arith.constant 16 : i32
    %35 = vector.broadcast %c16_i32_8 : i32 to vector<16x1xi32>
    %36 = arith.cmpi slt, %34, %35 : vector<16x1xi32>
    %c0_9 = arith.constant 0 : index
    %c0_10 = arith.constant 0 : index
    %37 = vector.load %arg4[%c0_9, %c0_10] : memref<16x1xf32, #tpu.memory_space<vmem>>, vector<16x1xf32>
    %38 = math.log %30 : vector<16x1xf32>
    %cst_11 = arith.constant 0.000000e+00 : f32
    %39 = vector.broadcast %cst_11 : f32 to vector<16x1xf32>
    %40 = arith.select %36, %38, %39 : vector<16x1xi1>, vector<16x1xf32>
    %41 = arith.addf %37, %40 : vector<16x1xf32>
    %c0_12 = arith.constant 0 : index
    %c0_13 = arith.constant 0 : index
    %42 = vector.load %arg4[%c0_12, %c0_13] : memref<16x1xf32, #tpu.memory_space<vmem>>, vector<16x1xf32>
    tpu.vector_store %arg4[%c0_12, %c0_13], %41 {strides = array<i32>} : memref<16x1xf32, #tpu.memory_space<vmem>>, vector<16x1xf32>,
    %c0_i32_14 = arith.constant 0 : i32
    %43 = arith.cmpi eq, %arg0, %c0_i32_14 : i32
    %44 = arith.extui %43 : i1 to i32
    %c0_i32_15 = arith.constant 0 : i32
    %45 = arith.cmpi ne, %44, %c0_i32_15 : i32
    scf.if %45 {
      %c0_16 = arith.constant 0 : index
      %c0_17 = arith.constant 0 : index
      %46 = vector.load %arg4[%c0_16, %c0_17] : memref<16x1xf32, #tpu.memory_space<vmem>>, vector<16x1xf32>
      %47 = vector.shape_cast %46 : vector<16x1xf32> to vector<1x16x1xf32>
      %cst_18 = arith.constant dense<0.000000e+00> : vector<1xf32>
      %48 = vector.multi_reduction <add>, %47, %cst_18 [1, 2] : vector<1x16x1xf32> to vector<1xf32>
      %49 = vector.shape_cast %48 : vector<1xf32> to vector<1x1x1xf32>
      %50 = vector.extract %49[0, 0, 0] : f32 from vector<1x1x1xf32>
      %cst_19 = arith.constant 0.000000e+00 : f32
      %51 = arith.subf %cst_19, %50 : f32
      %cst_20 = arith.constant 1.600000e+01 : f32
      %52 = arith.divf %51, %cst_20 : f32
      %53 = vector.broadcast %52 : f32 to vector<1x1xf32>
      %c0_21 = arith.constant 0 : index
      %c0_22 = arith.constant 0 : index
      %54 = vector.load %arg3[%c0_21, %c0_22] : memref<1x1xf32, #tpu.memory_space<vmem>>, vector<1x1xf32>
      tpu.vector_store %arg3[%c0_21, %c0_22], %53 {strides = array<i32>} : memref<1x1xf32, #tpu.memory_space<vmem>>, vector<1x1xf32>,
    } else {
    }
    return
  }
  func.func @transform_0(%arg0: i32) -> (i32, i32) {
    %c0_i32 = arith.constant 0 : i32
    %c0_i32_0 = arith.constant 0 : i32
    return %arg0, %c0_i32 : i32, i32
  }
  func.func @transform_1(%arg0: i32) -> (i32, i32) {
    %c0_i32 = arith.constant 0 : i32
    %c0_i32_0 = arith.constant 0 : i32
    %c0_i32_1 = arith.constant 0 : i32
    return %c0_i32, %c0_i32_0 : i32, i32
  }
  func.func @transform_2(%arg0: i32) -> (i32, i32) {
    %c0_i32 = arith.constant 0 : i32
    %c0_i32_0 = arith.constant 0 : i32
    %c0_i32_1 = arith.constant 0 : i32
    return %c0_i32, %c0_i32_0 : i32, i32
  }
}

</mosaic_0001>

<llo_original>
// kernel: tpu_custom_call.1
$region0: #{tpu_custom_call.1}
  #allocation0 [shape = 'u32[]', space=smem, size = 0x4, offset = 0x4, fixed_abs, tag = 'smem constant byte address 0x4 - core index']
  #allocation1 [shape = 'u32[144,128]{1,0:T(1,128)}', space=vmem, size = 0x12000, scoped, tag = 'internal scratch']
  #allocation2 [shape = 'f32[16,1]{1,0:T(8,128)}', space=vmem, size = 0x2000, scoped, tag = 'scratch operand']
  %s0 = inlined_call_operand.vmem [shape: f32[16,32], index: 0, kind: input, shape index: {}]
  %s1 = inlined_call_operand.vmem [shape: s32[16,1], index: 1, kind: input, shape index: {}]
  %s2 = inlined_call_operand.hbm [shape: f32[1,1], index: 2, kind: output, shape index: {}]
  %s3 = sld [smem:[#allocation0]]
  $region26: #{tpu_custom_call.1} parent=0
    _
  %s5 = ssub.s32 1, %s3
  %s6 = scalar_select 0, %s5, %s3
  $region1: #{tpu_custom_call.1} parent=0
    #allocation3 [shape = 'u8[512]{0}', space=vmem, size = 0x400, scoped, tag = 'output window, operand 0, single buffered']
    #allocation4 [shape = 's32[1]{0}', space=sflag, size = 0x4, scoped, tag = 'scoped memory for tpu_custom_call.1']
    %7 = vsyncpa [#allocation4], 0
    // Predicated region
    $region2: #{tpu_custom_call.1} parent=1 // pred_check
      _
    $region3: #{tpu_custom_call.1} parent=1 // pred_check_branch
      %9 = sbr.rel (0) target = $region5
    $region4: #{tpu_custom_call.1} parent=1 // pred_region
      _
    $region5: #{tpu_custom_call.1} parent=1 // pred_fallthru
      _
    // Predicated region
    $region6: #{tpu_custom_call.1} parent=1 // pred_check
      _
    $region7: #{tpu_custom_call.1} parent=1 // pred_check_branch
      %11 = sbr.rel (0) target = $region9
    $region8: #{tpu_custom_call.1} parent=1 // pred_region
      _
    $region9: #{tpu_custom_call.1} parent=1 // pred_fallthru
      _
    %p12 = scmp.eq.s32.totalorder 0, 0
    // Predicated region
    $region10: #{tpu_custom_call.1} parent=1 // pred_check
      %p13 = pneg %p12
    $region11: #{tpu_custom_call.1} parent=1 // pred_check_branch
      %15 = sbr.rel (%p13) target = $region13
    $region12: #{tpu_custom_call.1} parent=1 // pred_region
      %vm16 = vcmask 7168
      %17 = vst.msk [vmem:[#allocation2] sm:$0xff] %vm16, 0.0
      %18 = vst.msk [vmem:[#allocation2 + $0x8] sm:$0xff] %vm16, 0.0
    $region13: #{tpu_custom_call.1} parent=1 // pred_fallthru
      _
    %v19 = vld [vmem:[%s0] sm:$0xff]
    %v20 = vld [vmem:[%s0 + $0x8] sm:$0xff]
    %vm21 = vcmask 261120
    %v22 = vsel %vm21, %v19, -inf
    %23 = vmax.xlane.f32.xlu0 %v22
    %v24 = vpop.xlane.xlu0 %23
    %v25 = vsel %vm21, %v20, -inf
    %26 = vmax.xlane.f32.xlu0 %v25
    %v27 = vpop.xlane.xlu0 %26
    %v28 = vsub.f32 %v19, %v24
    %v29 = vsub.f32 %v20, %v27
    %v30 = vmul.f32 %v28, 1.442695
    %v31 = vpow.pop %v30
    %v32 = vmul.f32 %v29, 1.442695
    %v33 = vpow.pop %v32
    %v34 = vsel %vm21, %v31, 0.0
    %35 = vadd.xlane.f32.xlu0 %v34
    %v36 = vpop.xlane.xlu0 %35
    %v37 = vsel %vm21, %v33, 0.0
    %38 = vadd.xlane.f32.xlu0 %v37
    %v39 = vpop.xlane.xlu0 %38
    %v40 = vlog2.pop %v36
    %v41 = vmul.f32 %v40, 0.6931472
    %v42 = vlog2.pop %v39
    %v43 = vmul.f32 %v42, 0.6931472
    %v44 = vadd.f32 %v24, %v41
    %v45 = vadd.f32 %v27, %v43
    %s46 = smul.u32 0, 16
    %s47 = scalar_lea.vmem %s1, %s46
    %v48 = vld [vmem:[%s47] sm:$0xff]
    %v49 = vld [vmem:[%s47 + $0x8] sm:$0xff]
    %v50 = vlaneseq
    %v51 = vand.u32 %v50, 127
    %52 = vset.pattern.permute.xlu0 0
    %53 = vperm.xlu0 %52, %v48
    %v54 = vpop.permute.xlu0 %53
    %55 = vset.pattern.permute.xlu0 0
    %56 = vperm.xlu0 %55, %v49
    %v57 = vpop.permute.xlu0 %56
    %vm58 = vcmp.eq.s32.totalorder %v51, %v54
    %vm59 = vcmp.eq.s32.totalorder %v51, %v57
    %v60 = vsel %vm58, 1, 0
    %v61 = vsel %vm59, 1, 0
    %v62 = vcvt.s32.f32 %v60
    %v63 = vcvt.s32.f32 %v61
    %v64 = vmul.f32 %v62, %v19
    %v65 = vmul.f32 %v63, %v20
    %v66 = vsel %vm21, %v64, 0.0
    %67 = vadd.xlane.f32.xlu0 %v66
    %v68 = vpop.xlane.xlu0 %67
    %v69 = vsel %vm21, %v65, 0.0
    %70 = vadd.xlane.f32.xlu0 %v69
    %v71 = vpop.xlane.xlu0 %70
    %v72 = vsub.f32 %v68, %v44
    %v73 = vsub.f32 %v71, %v45
    %v74 = vmul.f32 %v72, 1.442695
    %v75 = vpow.pop %v74
    %v76 = vmul.f32 %v73, 1.442695
    %v77 = vpow.pop %v76
    %v78 = vmul.f32 %v75, 0.8967742
    %v79 = vmul.f32 %v77, 0.8967742
    %v80 = vadd.f32 %v78, 0.0032258064
    %v81 = vadd.f32 %v79, 0.0032258064
    %v82 = vlaneseq
    %v83 = vshrl.u32 %v82, 7
    %v84 = vadd.s32 %v83, 8
    %v85 = vstv %s46
    %v86 = vadd.s32 %v83, %v85
    %v87 = vadd.s32 %v84, %v85
    %vm88 = vcmp.lt.s32.totalorder %v86, 16
    %vm89 = vcmp.lt.s32.totalorder %v87, 16
    %v90 = vld [vmem:[#allocation2] sm:$0xff]
    %v91 = vld [vmem:[#allocation2 + $0x8] sm:$0xff]
    %v92 = vlog2.pop %v80
    %v93 = vmul.f32 %v92, 0.6931472
    %v94 = vlog2.pop %v81
    %v95 = vmul.f32 %v94, 0.6931472
    %v96 = vsel %vm88, %v93, 0.0
    %v97 = vsel %vm89, %v95, 0.0
    %v98 = vadd.f32 %v90, %v96
    %v99 = vadd.f32 %v91, %v97
    %vm100 = vcmask 7168
    %101 = vst.msk [vmem:[#allocation2] sm:$0xff] %vm100, %v98
    %102 = vst.msk [vmem:[#allocation2 + $0x8] sm:$0xff] %vm100, %v99
    // Predicated region
    $region14: #{tpu_custom_call.1} parent=1 // pred_check
      %p103 = pneg %p12
    $region15: #{tpu_custom_call.1} parent=1 // pred_check_branch
      %105 = sbr.rel (%p103) target = $region17
    $region16: #{tpu_custom_call.1} parent=1 // pred_region
      %v106 = vld [vmem:[#allocation2] sm:$0xff]
      %v107 = vld [vmem:[#allocation2 + $0x8] sm:$0xff]
      %v108 = vsel %vm100, %v106, 0.0
      %v109 = vsel %vm100, %v107, 0.0
      %v110 = vadd.f32 %v108, %v109
      %111 = vadd.xlane.f32.xlu0 %v110
      %v112 = vpop.xlane.xlu0 %111
      %v113 = vrot.slane %v112, 4
      %v114 = vadd.f32 %v112, %v113
      %v115 = vrot.slane %v114, 2
      %v116 = vadd.f32 %v114, %v115
      %v117 = vrot.slane %v116, 1
      %v118 = vadd.f32 %v116, %v117
      %s119 = vtos %v118
      %s120 = ssub.f32 0.0, %s119
      %v121 = vrcp.pop 16.0
      %s122 = vtos %v121
      %s123 = smul.f32 %s120, %s122
      %v124 = vstv %s123
      %vm125 = vcmask 0
      %126 = vst.msk [vmem:[#allocation3] sm:$0x1] %vm125, %v124
    $region17: #{tpu_custom_call.1} parent=1 // pred_fallthru
      _
    // Predicated region
    $region18: #{tpu_custom_call.1} parent=1 // pred_check
      _
    $region19: #{tpu_custom_call.1} parent=1 // pred_check_branch
      %128 = sbr.rel (0) target = $region21
    $region20: #{tpu_custom_call.1} parent=1 // pred_region
      %s130 = ssub.s32 16, 16
      %131 = vsyncadd [#allocation4], %s130
      %s133 = sshll.u32 [#allocation3], 4
      %s134 = int_to_ptr.vmem [resolvable:$true] %s133
      %136 = dma.vmem_to_hbm [thread:$0]  %s134, 16, %s2, [#allocation4]
    $region21: #{tpu_custom_call.1} parent=1 // pred_fallthru
      _
    // Predicated region
    $region22: #{tpu_custom_call.1} parent=1 // pred_check
      _
    $region23: #{tpu_custom_call.1} parent=1 // pred_check_branch
      %138 = sbr.rel (0) target = $region25
    $region24: #{tpu_custom_call.1} parent=1 // pred_region
      %139 = dma.done [#allocation4], 16
    $region25: #{tpu_custom_call.1} parent=1 // pred_fallthru
      _
    %140 = vsyncpa [#allocation4], 1

</llo_original>
